<compile_context>
chip_gen: v7x
topology: tpu7x:2x2x1
jax: 0.10.0
libtpu: 0.0.40
codegen_flags: <defaults>
</compile_context>

<pallas_src>
import jax
import jax.numpy as jnp
from jax.experimental import pallas as pl
from jax.experimental.pallas import tpu as pltpu

NEG_SLOPE = 0.01          # nn.LeakyReLU() default negative_slope
LANE = 128
SUBLANE = 8
HIDDEN = (512, 256, 128)
SMALL_BATCH = 512         # below this, run the whole batch as one tile


def _round_up(n, m):
    return (n + m - 1) // m * m


def _cdiv(a, b):
    return -(-a // b)


def _leaky_relu(h):
    return jnp.where(h >= 0, h, NEG_SLOPE * h)


def dqn_kernel(x_ref,
               w1_ref, b1_ref,
               w2_ref, b2_ref,
               w3_ref, b3_ref,
               w4_ref, b4_ref,
               o_ref):
    # x tile: (TB, obs) bf16. Weights: bf16, VMEM-resident across all batch
    # tiles. Biases: f32 (1, out) rows. MXU accumulates in f32; activations
    # are cast to bf16 only at the matmul inputs so LeakyReLU stays on the
    # f32 VPU path on every TPU generation.
    h = jnp.dot(x_ref[...], w1_ref[...],
                preferred_element_type=jnp.float32) + b1_ref[...]
    h = _leaky_relu(h)
    h = jnp.dot(h.astype(jnp.bfloat16), w2_ref[...],
                preferred_element_type=jnp.float32) + b2_ref[...]
    h = _leaky_relu(h)
    h = jnp.dot(h.astype(jnp.bfloat16), w3_ref[...],
                preferred_element_type=jnp.float32) + b3_ref[...]
    h = _leaky_relu(h)
    # Lane-dense (TB, 128) output store; padded action columns (zero weights
    # and zero bias there) are sliced away outside the pallas_call.
    o_ref[...] = jnp.dot(h.astype(jnp.bfloat16), w4_ref[...],
                         preferred_element_type=jnp.float32) + b4_ref[...]


def dqn_forward(x, params, action_size, *, block_b=2048):
    """x: (B, obs) float32.
    params: 4 x (W, b); W bf16 with true input width (obs on layer 1) and
    output width padded to HIDDEN / 128-padded action; b f32 (1, out_pad)."""
    (w1, b1), (w2, b2), (w3, b3), (w4, b4) = params
    B, obs = x.shape
    assert w1.shape[0] == obs, "layer-1 weight must match obs width"
    out_pad = w4.shape[1]

    # Adaptive batch tiling:
    #  * small batches -> one tile (one grid step, no pipeline bookkeeping)
    #  * large batches -> >= 2 tiles (v7x megacore), tile a multiple of 128
    #    (MXU / sublane granularity), padding waste < 128 rows per tile.
    b8 = _round_up(B, SUBLANE)
    if b8 <= SMALL_BATCH:
        num_tiles, tb = 1, b8
    else:
        num_tiles = max(2, _cdiv(b8, block_b))
        tb = _round_up(_cdiv(b8, num_tiles), LANE)
    b_pad = num_tiles * tb

    # Pad only along batch and cast to bf16 (no 128-wide f32 slab in HBM).
    x_bf = x.astype(jnp.bfloat16)
    if b_pad != B:
        x_bf = jnp.pad(x_bf, ((0, b_pad - B), (0, 0)))

    def resident(shape):
        # Same block every grid step -> stays VMEM-resident (no re-DMA).
        return pl.BlockSpec(shape, lambda i: (0, 0))

    flops = 2 * b_pad * (obs * HIDDEN[0]
                         + HIDDEN[0] * HIDDEN[1]
                         + HIDDEN[1] * HIDDEN[2]
                         + HIDDEN[2] * out_pad)
    weight_bytes = sum(int(w.size) * w.dtype.itemsize
                       + int(b.size) * b.dtype.itemsize for w, b in params)
    bytes_accessed = weight_bytes + int(x_bf.size) * 2 + b_pad * out_pad * 4

    out_padded = pl.pallas_call(
        dqn_kernel,
        out_shape=jax.ShapeDtypeStruct((b_pad, out_pad), jnp.float32),
        grid=(num_tiles,),
        in_specs=[
            # x: last block dim == full array dim (obs), legal and lane-thin.
            pl.BlockSpec((tb, obs), lambda i: (i, 0)),
            resident(w1.shape), resident(b1.shape),
            resident(w2.shape), resident(b2.shape),
            resident(w3.shape), resident(b3.shape),
            resident(w4.shape), resident(b4.shape),
        ],
        out_specs=pl.BlockSpec((tb, out_pad), lambda i: (i, 0)),
        compiler_params=pltpu.CompilerParams(
            dimension_semantics=("parallel",),
            # Raise v5e's 16 MiB default so the 2048-row tile never spills;
            # 32 MiB is the default on v6e/v7x and well under v7x's 64 MiB.
            vmem_limit_bytes=32 * 1024 * 1024),
        cost_estimate=pl.CostEstimate(
            flops=flops, transcendentals=0, bytes_accessed=bytes_accessed),
    )(x_bf, w1, b1, w2, b2, w3, b3, w4, b4)

    return out_padded[:B, :action_size]


def init_params(key, observation_size, action_size):
    """PyTorch-style uniform(-1/sqrt(fan_in), 1/sqrt(fan_in)) init. Weights
    keep their true input width; output width is padded to 128 on the last
    layer only. Weights bf16, biases f32."""
    sizes = [observation_size, *HIDDEN, action_size]
    out_pads = [*HIDDEN, _round_up(action_size, LANE)]
    params = []
    for i in range(4):
        fan_in, fan_out = sizes[i], sizes[i + 1]
        out_p = out_pads[i]
        key, kw, kb = jax.random.split(key, 3)
        bound = 1.0 / jnp.sqrt(jnp.float32(fan_in))
        w = jax.random.uniform(kw, (fan_in, fan_out), jnp.float32, -bound, bound)
        b = jax.random.uniform(kb, (1, fan_out), jnp.float32, -bound, bound)
        w_p = jnp.zeros((fan_in, out_p), jnp.float32).at[:, :fan_out].set(w)
        b_p = jnp.zeros((1, out_p), jnp.float32).at[:, :fan_out].set(b)
        params.append((w_p.astype(jnp.bfloat16), b_p))
    return params


def dqn_reference(x, params, action_size):
    """Pure-JAX reference with identical bf16-weight / f32-accumulation
    quantization (fidelity vs an f32 PyTorch DQN is bf16-level by design)."""
    h_in = x.astype(jnp.bfloat16)
    h = None
    for i, (w, b) in enumerate(params):
        h = jnp.dot(h_in, w, preferred_element_type=jnp.float32) + b
        if i < 3:
            h_in = _leaky_relu(h).astype(jnp.bfloat16)
    return h[:, :action_size]


if __name__ == "__main__":
    observation_size = 16
    action_size = 4

    key = jax.random.PRNGKey(0)
    key, kx1, kx2 = jax.random.split(key, 3)
    params = init_params(key, observation_size, action_size)

    # 1) Inference-sized batch -> single-tile fast path.
    x_small = jax.random.normal(kx1, (8, observation_size), jnp.float32)
    out_small = jax.block_until_ready(dqn_forward(x_small, params, action_size))
    ref_small = dqn_reference(x_small, params, action_size)
    assert out_small.shape == (8, action_size)
    assert jnp.allclose(out_small, ref_small, atol=1e-3, rtol=1e-3), \
        "small-batch mismatch vs reference"

    # 2) Awkward larger batch (forces multi-tile grid + batch padding); the
    #    tile is shrunk via block_b so the test stays small while exercising
    #    the pipelined path.
    x_big = jax.random.normal(kx2, (600, observation_size), jnp.float32)
    out_big = jax.block_until_ready(
        dqn_forward(x_big, params, action_size, block_b=256))
    ref_big = dqn_reference(x_big, params, action_size)
    assert out_big.shape == (600, action_size)
    assert jnp.allclose(out_big, ref_big, atol=1e-3, rtol=1e-3), \
        "large-batch mismatch vs reference"

    print("KERNEL_OK")
</pallas_src>

<mosaic_0001>
module attributes {stable_mosaic.version = 11 : i64} {
  func.func @dqn_kernel(%arg0: i32, %arg1: memref<8x16xbf16, #tpu.memory_space<vmem>>, %arg2: memref<16x512xbf16, #tpu.memory_space<vmem>>, %arg3: memref<1x512xf32, #tpu.memory_space<vmem>>, %arg4: memref<512x256xbf16, #tpu.memory_space<vmem>>, %arg5: memref<1x256xf32, #tpu.memory_space<vmem>>, %arg6: memref<256x128xbf16, #tpu.memory_space<vmem>>, %arg7: memref<1x128xf32, #tpu.memory_space<vmem>>, %arg8: memref<128x128xbf16, #tpu.memory_space<vmem>>, %arg9: memref<1x128xf32, #tpu.memory_space<vmem>>, %arg10: memref<8x128xf32, #tpu.memory_space<vmem>>) attributes {dimension_semantics = [#tpu.dimension_semantics<parallel>], iteration_bounds = array<i64: 1>, scalar_prefetch = 0 : i64, scratch_operands = 0 : i64, tpu.core_type = #tpu.core_type<tc>, window_params = [{transform_indices = @transform_0, window_bounds = array<i64: 8, 16>}, {pipeline_mode = #tpu.pipeline_mode<synchronous>, transform_indices = @transform_1, window_bounds = array<i64: 16, 512>}, {pipeline_mode = #tpu.pipeline_mode<synchronous>, transform_indices = @transform_2, window_bounds = array<i64: 1, 512>}, {pipeline_mode = #tpu.pipeline_mode<synchronous>, transform_indices = @transform_3, window_bounds = array<i64: 512, 256>}, {pipeline_mode = #tpu.pipeline_mode<synchronous>, transform_indices = @transform_4, window_bounds = array<i64: 1, 256>}, {pipeline_mode = #tpu.pipeline_mode<synchronous>, transform_indices = @transform_5, window_bounds = array<i64: 256, 128>}, {pipeline_mode = #tpu.pipeline_mode<synchronous>, transform_indices = @transform_6, window_bounds = array<i64: 1, 128>}, {pipeline_mode = #tpu.pipeline_mode<synchronous>, transform_indices = @transform_7, window_bounds = array<i64: 128, 128>}, {pipeline_mode = #tpu.pipeline_mode<synchronous>, transform_indices = @transform_8, window_bounds = array<i64: 1, 128>}, {transform_indices = @transform_9, window_bounds = array<i64: 8, 128>}]} {
    %c0 = arith.constant 0 : index
    %c0_0 = arith.constant 0 : index
    %0 = vector.load %arg1[%c0, %c0_0] : memref<8x16xbf16, #tpu.memory_space<vmem>>, vector<8x16xbf16>
    %c0_1 = arith.constant 0 : index
    %c0_2 = arith.constant 0 : index
    %1 = vector.load %arg2[%c0_1, %c0_2] : memref<16x512xbf16, #tpu.memory_space<vmem>>, vector<16x512xbf16>
    %cst = arith.constant dense<0.000000e+00> : vector<8x512xf32>
    %2 = tpu.matmul %0, %1, %cst {dimension_numbers = #tpu.dot_dimension_numbers<[1], [0], [0], [1], [0, 0, 1, 1], [], []>} : vector<8x16xbf16>, vector<16x512xbf16>, vector<8x512xf32> -> vector<8x512xf32>
    %c0_3 = arith.constant 0 : index
    %c0_4 = arith.constant 0 : index
    %3 = vector.load %arg3[%c0_3, %c0_4] : memref<1x512xf32, #tpu.memory_space<vmem>>, vector<1x512xf32>
    %4 = vector.broadcast %3 : vector<1x512xf32> to vector<8x512xf32>
    %5 = arith.addf %2, %4 : vector<8x512xf32>
    %cst_5 = arith.constant 0.000000e+00 : f32
    %6 = vector.broadcast %cst_5 : f32 to vector<8x512xf32>
    %7 = arith.cmpf oge, %5, %6 : vector<8x512xf32>
    %cst_6 = arith.constant 0.00999999977 : f32
    %8 = vector.broadcast %cst_6 : f32 to vector<8x512xf32>
    %9 = arith.mulf %8, %5 : vector<8x512xf32>
    %10 = arith.select %7, %5, %9 : vector<8x512xi1>, vector<8x512xf32>
    %11 = arith.truncf %10 : vector<8x512xf32> to vector<8x512xbf16>
    %c0_7 = arith.constant 0 : index
    %c0_8 = arith.constant 0 : index
    %12 = vector.load %arg4[%c0_7, %c0_8] : memref<512x256xbf16, #tpu.memory_space<vmem>>, vector<512x256xbf16>
    %cst_9 = arith.constant dense<0.000000e+00> : vector<8x256xf32>
    %13 = tpu.matmul %11, %12, %cst_9 {dimension_numbers = #tpu.dot_dimension_numbers<[1], [0], [0], [1], [0, 0, 1, 1], [], []>} : vector<8x512xbf16>, vector<512x256xbf16>, vector<8x256xf32> -> vector<8x256xf32>
    %c0_10 = arith.constant 0 : index
    %c0_11 = arith.constant 0 : index
    %14 = vector.load %arg5[%c0_10, %c0_11] : memref<1x256xf32, #tpu.memory_space<vmem>>, vector<1x256xf32>
    %15 = vector.broadcast %14 : vector<1x256xf32> to vector<8x256xf32>
    %16 = arith.addf %13, %15 : vector<8x256xf32>
    %cst_12 = arith.constant 0.000000e+00 : f32
    %17 = vector.broadcast %cst_12 : f32 to vector<8x256xf32>
    %18 = arith.cmpf oge, %16, %17 : vector<8x256xf32>
    %cst_13 = arith.constant 0.00999999977 : f32
    %19 = vector.broadcast %cst_13 : f32 to vector<8x256xf32>
    %20 = arith.mulf %19, %16 : vector<8x256xf32>
    %21 = arith.select %18, %16, %20 : vector<8x256xi1>, vector<8x256xf32>
    %22 = arith.truncf %21 : vector<8x256xf32> to vector<8x256xbf16>
    %c0_14 = arith.constant 0 : index
    %c0_15 = arith.constant 0 : index
    %23 = vector.load %arg6[%c0_14, %c0_15] : memref<256x128xbf16, #tpu.memory_space<vmem>>, vector<256x128xbf16>
    %cst_16 = arith.constant dense<0.000000e+00> : vector<8x128xf32>
    %24 = tpu.matmul %22, %23, %cst_16 {dimension_numbers = #tpu.dot_dimension_numbers<[1], [0], [0], [1], [0, 0, 1, 1], [], []>} : vector<8x256xbf16>, vector<256x128xbf16>, vector<8x128xf32> -> vector<8x128xf32>
    %c0_17 = arith.constant 0 : index
    %c0_18 = arith.constant 0 : index
    %25 = vector.load %arg7[%c0_17, %c0_18] : memref<1x128xf32, #tpu.memory_space<vmem>>, vector<1x128xf32>
    %26 = vector.broadcast %25 : vector<1x128xf32> to vector<8x128xf32>
    %27 = arith.addf %24, %26 : vector<8x128xf32>
    %cst_19 = arith.constant 0.000000e+00 : f32
    %28 = vector.broadcast %cst_19 : f32 to vector<8x128xf32>
    %29 = arith.cmpf oge, %27, %28 : vector<8x128xf32>
    %cst_20 = arith.constant 0.00999999977 : f32
    %30 = vector.broadcast %cst_20 : f32 to vector<8x128xf32>
    %31 = arith.mulf %30, %27 : vector<8x128xf32>
    %32 = arith.select %29, %27, %31 : vector<8x128xi1>, vector<8x128xf32>
    %33 = arith.truncf %32 : vector<8x128xf32> to vector<8x128xbf16>
    %c0_21 = arith.constant 0 : index
    %c0_22 = arith.constant 0 : index
    %34 = vector.load %arg8[%c0_21, %c0_22] : memref<128x128xbf16, #tpu.memory_space<vmem>>, vector<128x128xbf16>
    %cst_23 = arith.constant dense<0.000000e+00> : vector<8x128xf32>
    %35 = tpu.matmul %33, %34, %cst_23 {dimension_numbers = #tpu.dot_dimension_numbers<[1], [0], [0], [1], [0, 0, 1, 1], [], []>} : vector<8x128xbf16>, vector<128x128xbf16>, vector<8x128xf32> -> vector<8x128xf32>
    %c0_24 = arith.constant 0 : index
    %c0_25 = arith.constant 0 : index
    %36 = vector.load %arg9[%c0_24, %c0_25] : memref<1x128xf32, #tpu.memory_space<vmem>>, vector<1x128xf32>
    %37 = vector.broadcast %36 : vector<1x128xf32> to vector<8x128xf32>
    %38 = arith.addf %35, %37 : vector<8x128xf32>
    %c0_26 = arith.constant 0 : index
    %c0_27 = arith.constant 0 : index
    %39 = vector.load %arg10[%c0_26, %c0_27] : memref<8x128xf32, #tpu.memory_space<vmem>>, vector<8x128xf32>
    tpu.vector_store %arg10[%c0_26, %c0_27], %38 {strides = array<i32>} : memref<8x128xf32, #tpu.memory_space<vmem>>, vector<8x128xf32>,
    return
  }
  func.func @transform_0(%arg0: i32) -> (i32, i32) {
    %c0_i32 = arith.constant 0 : i32
    %c0_i32_0 = arith.constant 0 : i32
    return %arg0, %c0_i32 : i32, i32
  }
  func.func @transform_1(%arg0: i32) -> (i32, i32) {
    %c0_i32 = arith.constant 0 : i32
    %c0_i32_0 = arith.constant 0 : i32
    %c0_i32_1 = arith.constant 0 : i32
    return %c0_i32, %c0_i32_0 : i32, i32
  }
  func.func @transform_2(%arg0: i32) -> (i32, i32) {
    %c0_i32 = arith.constant 0 : i32
    %c0_i32_0 = arith.constant 0 : i32
    %c0_i32_1 = arith.constant 0 : i32
    return %c0_i32, %c0_i32_0 : i32, i32
  }
  func.func @transform_3(%arg0: i32) -> (i32, i32) {
    %c0_i32 = arith.constant 0 : i32
    %c0_i32_0 = arith.constant 0 : i32
    %c0_i32_1 = arith.constant 0 : i32
    return %c0_i32, %c0_i32_0 : i32, i32
  }
  func.func @transform_4(%arg0: i32) -> (i32, i32) {
    %c0_i32 = arith.constant 0 : i32
    %c0_i32_0 = arith.constant 0 : i32
    %c0_i32_1 = arith.constant 0 : i32
    return %c0_i32, %c0_i32_0 : i32, i32
  }
  func.func @transform_5(%arg0: i32) -> (i32, i32) {
    %c0_i32 = arith.constant 0 : i32
    %c0_i32_0 = arith.constant 0 : i32
    %c0_i32_1 = arith.constant 0 : i32
    return %c0_i32, %c0_i32_0 : i32, i32
  }
  func.func @transform_6(%arg0: i32) -> (i32, i32) {
    %c0_i32 = arith.constant 0 : i32
    %c0_i32_0 = arith.constant 0 : i32
    %c0_i32_1 = arith.constant 0 : i32
    return %c0_i32, %c0_i32_0 : i32, i32
  }
  func.func @transform_7(%arg0: i32) -> (i32, i32) {
    %c0_i32 = arith.constant 0 : i32
    %c0_i32_0 = arith.constant 0 : i32
    %c0_i32_1 = arith.constant 0 : i32
    return %c0_i32, %c0_i32_0 : i32, i32
  }
  func.func @transform_8(%arg0: i32) -> (i32, i32) {
    %c0_i32 = arith.constant 0 : i32
    %c0_i32_0 = arith.constant 0 : i32
    %c0_i32_1 = arith.constant 0 : i32
    return %c0_i32, %c0_i32_0 : i32, i32
  }
  func.func @transform_9(%arg0: i32) -> (i32, i32) {
    %c0_i32 = arith.constant 0 : i32
    %c0_i32_0 = arith.constant 0 : i32
    return %arg0, %c0_i32 : i32, i32
  }
}

</mosaic_0001>

<llo_original>
// kernel: tpu_custom_call.1
$region0: #{tpu_custom_call.1}
  #allocation0 [shape = 'u32[]', space=smem, size = 0x4, offset = 0x4, fixed_abs, tag = 'smem constant byte address 0x4 - core index']
  #allocation1 [shape = 'u32[144,128]{1,0:T(1,128)}', space=vmem, size = 0x12000, scoped, tag = 'internal scratch']
  %s0 = inlined_call_operand.hbm [shape: bf16[8,16], index: 0, kind: input, shape index: {}]
  %s1 = inlined_call_operand.hbm [shape: bf16[16,512], index: 1, kind: input, shape index: {}]
  %s2 = inlined_call_operand.vmem [shape: f32[1,512], index: 2, kind: input, shape index: {}]
  %s3 = inlined_call_operand.hbm [shape: bf16[512,256], index: 3, kind: input, shape index: {}]
  %s4 = inlined_call_operand.vmem [shape: f32[1,256], index: 4, kind: input, shape index: {}]
  %s5 = inlined_call_operand.hbm [shape: bf16[256,128], index: 5, kind: input, shape index: {}]
  %s6 = inlined_call_operand.vmem [shape: f32[1,128], index: 6, kind: input, shape index: {}]
  %s7 = inlined_call_operand.hbm [shape: bf16[128,128], index: 7, kind: input, shape index: {}]
  %s8 = inlined_call_operand.vmem [shape: f32[1,128], index: 8, kind: input, shape index: {}]
  %s9 = inlined_call_operand.hbm [shape: f32[8,128], index: 9, kind: output, shape index: {}]
  %s10 = sld [smem:[#allocation0]]
  $region66: #{tpu_custom_call.1} parent=0
    _
  %s12 = ssub.s32 1, %s10
  %s13 = scalar_select 0, %s12, %s10
  $region1: #{tpu_custom_call.1} parent=0
    #allocation2 [shape = 'u8[2048]{0}', space=vmem, size = 0x800, scoped, tag = 'input window, operand 0, single buffered']
    #allocation3 [shape = 's32[1]{0}', space=sflag, size = 0x4, scoped, tag = 'scoped memory for tpu_custom_call.1']
    #allocation4 [shape = 's32[1]{0}', space=sflag, size = 0x4, scoped, tag = 'scoped memory for tpu_custom_call.1']
    #allocation5 [shape = 'u8[16384]{0}', space=vmem, size = 0x4000, scoped, tag = 'input window, operand 1, single buffered']
    #allocation6 [shape = 's32[1]{0}', space=sflag, size = 0x4, scoped, tag = 'scoped memory for tpu_custom_call.1']
    #allocation7 [shape = 'u8[262144]{0}', space=vmem, size = 0x40000, scoped, tag = 'input window, operand 3, single buffered']
    #allocation8 [shape = 'u8[65536]{0}', space=vmem, size = 0x10000, scoped, tag = 'input window, operand 5, single buffered']
    #allocation9 [shape = 's32[1]{0}', space=sflag, size = 0x4, scoped, tag = 'scoped memory for tpu_custom_call.1']
    #allocation10 [shape = 'u8[32768]{0}', space=vmem, size = 0x8000, scoped, tag = 'input window, operand 7, single buffered']
    #allocation11 [shape = 'u8[4096]{0}', space=vmem, size = 0x1000, scoped, tag = 'output window, operand 0, single buffered']
    %14 = vsyncpa [#allocation3], 0
    %15 = vsyncpa [#allocation6], 0
    %16 = vsyncpa [#allocation9], 0
    %17 = vsyncpa [#allocation4], 0
    // Predicated region
    $region2: #{tpu_custom_call.1} parent=1 // pred_check
      _
    $region3: #{tpu_custom_call.1} parent=1 // pred_check_branch
      %19 = sbr.rel (0) target = $region5
    $region4: #{tpu_custom_call.1} parent=1 // pred_region
      %s21 = ssub.s32 64, 64
      %22 = vsyncadd [#allocation3], %s21
      %s24 = sshll.u32 [#allocation2], 4
      %s25 = int_to_ptr.vmem [resolvable:$true] %s24
      %27 = dma.hbm_to_vmem [thread:$0]  %s0, 64, %s25, [#allocation3]
    $region5: #{tpu_custom_call.1} parent=1 // pred_fallthru
      _
    // Predicated region
    $region6: #{tpu_custom_call.1} parent=1 // pred_check
      _
    $region7: #{tpu_custom_call.1} parent=1 // pred_check_branch
      %29 = sbr.rel (0) target = $region9
    $region8: #{tpu_custom_call.1} parent=1 // pred_region
      %s31 = ssub.s32 512, 512
      %32 = vsyncadd [#allocation6], %s31
      %s33 = sshll.u32 [#allocation5], 4
      %s34 = int_to_ptr.vmem [resolvable:$true] %s33
      %39 = dma.hbm_to_vmem [thread:$0]  %s1, 512, %s34, [#allocation6], 256, 256, 16
    $region9: #{tpu_custom_call.1} parent=1 // pred_fallthru
      _
    // Predicated region
    $region10: #{tpu_custom_call.1} parent=1 // pred_check
      _
    $region11: #{tpu_custom_call.1} parent=1 // pred_check_branch
      %41 = sbr.rel (0) target = $region13
    $region12: #{tpu_custom_call.1} parent=1 // pred_region
      _
    $region13: #{tpu_custom_call.1} parent=1 // pred_fallthru
      _
    // Predicated region
    $region14: #{tpu_custom_call.1} parent=1 // pred_check
      _
    $region15: #{tpu_custom_call.1} parent=1 // pred_check_branch
      %43 = sbr.rel (0) target = $region17
    $region16: #{tpu_custom_call.1} parent=1 // pred_region
      %s45 = ssub.s32 8192, 8192
      %46 = vsyncadd [#allocation6], %s45
      %s47 = sshll.u32 [#allocation7], 4
      %s48 = int_to_ptr.vmem [resolvable:$true] %s47
      %53 = dma.hbm_to_vmem [thread:$0]  %s3, 8192, %s48, [#allocation6], 128, 128, 8
    $region17: #{tpu_custom_call.1} parent=1 // pred_fallthru
      _
    // Predicated region
    $region18: #{tpu_custom_call.1} parent=1 // pred_check
      _
    $region19: #{tpu_custom_call.1} parent=1 // pred_check_branch
      %55 = sbr.rel (0) target = $region21
    $region20: #{tpu_custom_call.1} parent=1 // pred_region
      _
    $region21: #{tpu_custom_call.1} parent=1 // pred_fallthru
      _
    // Predicated region
    $region22: #{tpu_custom_call.1} parent=1 // pred_check
      _
    $region23: #{tpu_custom_call.1} parent=1 // pred_check_branch
      %57 = sbr.rel (0) target = $region25
    $region24: #{tpu_custom_call.1} parent=1 // pred_region
      %s59 = ssub.s32 2048, 2048
      %60 = vsyncadd [#allocation9], %s59
      %s61 = sshll.u32 [#allocation8], 4
      %s62 = int_to_ptr.vmem [resolvable:$true] %s61
      %67 = dma.hbm_to_vmem [thread:$0]  %s5, 2048, %s62, [#allocation9], 64, 64, 4
    $region25: #{tpu_custom_call.1} parent=1 // pred_fallthru
      _
    // Predicated region
    $region26: #{tpu_custom_call.1} parent=1 // pred_check
      _
    $region27: #{tpu_custom_call.1} parent=1 // pred_check_branch
      %69 = sbr.rel (0) target = $region29
    $region28: #{tpu_custom_call.1} parent=1 // pred_region
      _
    $region29: #{tpu_custom_call.1} parent=1 // pred_fallthru
      _
    // Predicated region
    $region30: #{tpu_custom_call.1} parent=1 // pred_check
      _
    $region31: #{tpu_custom_call.1} parent=1 // pred_check_branch
      %71 = sbr.rel (0) target = $region33
    $region32: #{tpu_custom_call.1} parent=1 // pred_region
      %s73 = ssub.s32 1024, 1024
      %74 = vsyncadd [#allocation9], %s73
      %s75 = sshll.u32 [#allocation10], 4
      %s76 = int_to_ptr.vmem [resolvable:$true] %s75
      %81 = dma.hbm_to_vmem [thread:$0]  %s7, 1024, %s76, [#allocation9], 64, 64, 4
    $region33: #{tpu_custom_call.1} parent=1 // pred_fallthru
      _
    // Predicated region
    $region34: #{tpu_custom_call.1} parent=1 // pred_check
      _
    $region35: #{tpu_custom_call.1} parent=1 // pred_check_branch
      %83 = sbr.rel (0) target = $region37
    $region36: #{tpu_custom_call.1} parent=1 // pred_region
      _
    $region37: #{tpu_custom_call.1} parent=1 // pred_fallthru
      _
    // Predicated region
    $region38: #{tpu_custom_call.1} parent=1 // pred_check
      _
    $region39: #{tpu_custom_call.1} parent=1 // pred_check_branch
      %85 = sbr.rel (0) target = $region41
    $region40: #{tpu_custom_call.1} parent=1 // pred_region
      %86 = dma.done [#allocation3], 64
    $region41: #{tpu_custom_call.1} parent=1 // pred_fallthru
      _
    // Predicated region
    $region42: #{tpu_custom_call.1} parent=1 // pred_check
      _
    $region43: #{tpu_custom_call.1} parent=1 // pred_check_branch
      %88 = sbr.rel (0) target = $region45
    $region44: #{tpu_custom_call.1} parent=1 // pred_region
      %89 = dma.done [#allocation6], 512
    $region45: #{tpu_custom_call.1} parent=1 // pred_fallthru
      _
    // Predicated region
    $region46: #{tpu_custom_call.1} parent=1 // pred_check
      _
    $region47: #{tpu_custom_call.1} parent=1 // pred_check_branch
      %91 = sbr.rel (0) target = $region49
    $region48: #{tpu_custom_call.1} parent=1 // pred_region
      %92 = dma.done [#allocation6], 8192
    $region49: #{tpu_custom_call.1} parent=1 // pred_fallthru
      _
    // Predicated region
    $region50: #{tpu_custom_call.1} parent=1 // pred_check
      _
    $region51: #{tpu_custom_call.1} parent=1 // pred_check_branch
      %94 = sbr.rel (0) target = $region53
    $region52: #{tpu_custom_call.1} parent=1 // pred_region
      %95 = dma.done [#allocation9], 2048
    $region53: #{tpu_custom_call.1} parent=1 // pred_fallthru
      _
    // Predicated region
    $region54: #{tpu_custom_call.1} parent=1 // pred_check
      _
    $region55: #{tpu_custom_call.1} parent=1 // pred_check_branch
      %97 = sbr.rel (0) target = $region57
    $region56: #{tpu_custom_call.1} parent=1 // pred_region
      %98 = dma.done [#allocation9], 1024
    $region57: #{tpu_custom_call.1} parent=1 // pred_fallthru
      _
    %v100 = vld [vmem:[#allocation2] sm:$0xf]
    %v101 = vld [vmem:[#allocation5] sm:$0xff]
    %v102 = vld [vmem:[#allocation5 + $0x8] sm:$0xff]
    %v103 = vld [vmem:[#allocation5 + $0x10] sm:$0xff]
    %v104 = vld [vmem:[#allocation5 + $0x18] sm:$0xff]
    %v105 = vld [vmem:[%s2] sm:$0xf]
    %v107 = vlaneseq
    %v108 = vshrl.u32 %v107, 7
    %v109 = vsub.s32 0, %v108
    %v110 = vrot.slane %v105, %v109
    %v111 = vlaneseq
    %v112 = vshrl.u32 %v111, 7
    %v113 = vsub.s32 1, %v112
    %v114 = vrot.slane %v105, %v113
    %v115 = vlaneseq
    %v116 = vshrl.u32 %v115, 7
    %v117 = vsub.s32 2, %v116
    %v118 = vrot.slane %v105, %v117
    %v119 = vlaneseq
    %v120 = vshrl.u32 %v119, 7
    %v121 = vsub.s32 3, %v120
    %v122 = vrot.slane %v105, %v121
    %v131 = vunpack.c.l.b16 %v101
    %v132 = vunpack.c.h.b16 %v101
    %v133 = vunpack.c.l.b16 %v102
    %v134 = vunpack.c.h.b16 %v102
    %v135 = vunpack.c.l.b16 %v103
    %v136 = vunpack.c.h.b16 %v103
    %v137 = vunpack.c.l.b16 %v104
    %v138 = vunpack.c.h.b16 %v104
    %v139 = vpack.c.b16 %v135, %v131
    %v140 = vpack.c.b16 %v136, %v132
    %v141 = vpack.c.b16 %v137, %v133
    %v142 = vpack.c.b16 %v138, %v134
    %vm147 = vcmask 130048
    %v149 = vsel %vm147, %v100, 0
    %151 = vmatprep.subr.bf16.mxu0 %v140
    %152 = vmatpush1.bf16.msra.mxu0 %v139
    %153 = vmatprep.subr.bf16.mxu0 0
    %154 = vmatpush1.bf16.msra.mxu0 0
    %155 = vmatprep.subr.bf16.mxu0 0
    %156 = vmatpush1.bf16.msra.mxu0 0
    %157 = vmatprep.subr.bf16.mxu0 0
    %158 = vmatpush1.bf16.msra.mxu0 0
    %159 = vmatprep.subr.bf16.mxu0 0
    %160 = vmatpush1.bf16.msra.mxu0 0
    %161 = vmatprep.subr.bf16.mxu0 0
    %162 = vmatpush1.bf16.msra.mxu0 0
    %163 = vmatprep.subr.bf16.mxu0 0
    %164 = vmatpush1.bf16.msra.mxu0 0
    %165 = vmatprep.subr.bf16.mxu0 0
    %166 = vmatpush1.bf16.msra.mxu0 0
    %167 = vmatprep.subr.bf16.mxu0 0
    %168 = vmatpush1.bf16.msra.mxu0 0
    %169 = vmatprep.subr.bf16.mxu0 0
    %170 = vmatpush1.bf16.msra.mxu0 0
    %171 = vmatprep.subr.bf16.mxu0 0
    %172 = vmatpush1.bf16.msra.mxu0 0
    %173 = vmatprep.subr.bf16.mxu0 0
    %174 = vmatpush1.bf16.msra.mxu0 0
    %175 = vmatprep.subr.bf16.mxu0 0
    %176 = vmatpush1.bf16.msra.mxu0 0
    %177 = vmatprep.subr.bf16.mxu0 0
    %178 = vmatpush1.bf16.msra.mxu0 0
    %179 = vmatprep.subr.bf16.mxu0 0
    %180 = vmatpush1.bf16.msra.mxu0 0
    %181 = vmatprep.subr.bf16.mxu0 0
    %182 = vmatpush1.bf16.msra.mxu0 0
    %183 = vmatprep.mubr.bf16.mxu0 0
    %184 = vmatmul.mubr.bf16.gmra.mrb[0].mxu0 %v149
    %v185 = vpop.f32.mrb[0].mxu0
    %v186 = vadd.f32 %v110, %v185
    %v187 = vpop.f32.mrb[0].mxu0
    %v188 = vadd.f32 %v114, %v187
    %v189 = vpop.f32.mrb[0].mxu0
    %v190 = vpop.f32.mrb[0].mxu0
    %191 = vdwg.mxu0
    %192 = vmatprep.subr.bf16.mxu0 %v142
    %193 = vmatpush1.bf16.msra.mxu0 %v141
    %194 = vmatprep.subr.bf16.mxu0 0
    %195 = vmatpush1.bf16.msra.mxu0 0
    %196 = vmatprep.subr.bf16.mxu0 0
    %197 = vmatpush1.bf16.msra.mxu0 0
    %198 = vmatprep.subr.bf16.mxu0 0
    %199 = vmatpush1.bf16.msra.mxu0 0
    %200 = vmatprep.subr.bf16.mxu0 0
    %201 = vmatpush1.bf16.msra.mxu0 0
    %202 = vmatprep.subr.bf16.mxu0 0
    %203 = vmatpush1.bf16.msra.mxu0 0
    %204 = vmatprep.subr.bf16.mxu0 0
    %205 = vmatpush1.bf16.msra.mxu0 0
    %206 = vmatprep.subr.bf16.mxu0 0
    %207 = vmatpush1.bf16.msra.mxu0 0
    %208 = vmatprep.subr.bf16.mxu0 0
    %209 = vmatpush1.bf16.msra.mxu0 0
    %210 = vmatprep.subr.bf16.mxu0 0
    %211 = vmatpush1.bf16.msra.mxu0 0
    %212 = vmatprep.subr.bf16.mxu0 0
    %213 = vmatpush1.bf16.msra.mxu0 0
    %214 = vmatprep.subr.bf16.mxu0 0
    %215 = vmatpush1.bf16.msra.mxu0 0
    %216 = vmatprep.subr.bf16.mxu0 0
    %217 = vmatpush1.bf16.msra.mxu0 0
    %218 = vmatprep.subr.bf16.mxu0 0
    %219 = vmatpush1.bf16.msra.mxu0 0
    %220 = vmatprep.subr.bf16.mxu0 0
    %221 = vmatpush1.bf16.msra.mxu0 0
    %222 = vmatprep.subr.bf16.mxu0 0
    %223 = vmatpush1.bf16.msra.mxu0 0
    %224 = vmatprep.mubr.bf16.mxu0 0
    %225 = vmatmul.mubr.bf16.gmra.mrb[0].mxu0 %v149
    %v226 = vpop.f32.mrb[0].mxu0
    %v227 = vadd.f32 %v118, %v226
    %v228 = vpop.f32.mrb[0].mxu0
    %v229 = vadd.f32 %v122, %v228
    %v230 = vpop.f32.mrb[0].mxu0
    %v231 = vpop.f32.mrb[0].mxu0
    %232 = vdwg.mxu0
    %vm233 = vcmp.ge.f32.partialorder %v186, 0.0
    %vm234 = vcmp.ge.f32.partialorder %v188, 0.0
    %vm235 = vcmp.ge.f32.partialorder %v227, 0.0
    %vm236 = vcmp.ge.f32.partialorder %v229, 0.0
    %v237 = vmul.f32 %v186, 0.01
    %v238 = vmul.f32 %v188, 0.01
    %v239 = vmul.f32 %v227, 0.01
    %v240 = vmul.f32 %v229, 0.01
    %v241 = vsel %vm233, %v186, %v237
    %v242 = vsel %vm234, %v188, %v238
    %v243 = vsel %vm235, %v227, %v239
    %v244 = vsel %vm236, %v229, %v240
    %v245 = vpack.c.bf16 %v241, %v241
    %v246 = vpack.c.bf16 %v242, %v242
    %v247 = vpack.c.bf16 %v243, %v243
    %v248 = vpack.c.bf16 %v244, %v244
    %v249 = vld [vmem:[#allocation7] sm:$0xff]
    %v250 = vld [vmem:[#allocation7 + $0x8] sm:$0xff]
    %v251 = vld [vmem:[#allocation7 + $0x10] sm:$0xff]
    %v252 = vld [vmem:[#allocation7 + $0x18] sm:$0xff]
    %v253 = vld [vmem:[#allocation7 + $0x20] sm:$0xff]
    %v254 = vld [vmem:[#allocation7 + $0x28] sm:$0xff]
    %v255 = vld [vmem:[#allocation7 + $0x30] sm:$0xff]
    %v256 = vld [vmem:[#allocation7 + $0x38] sm:$0xff]
    %v257 = vld [vmem:[#allocation7 + $0x40] sm:$0xff]
    %v258 = vld [vmem:[#allocation7 + $0x48] sm:$0xff]
    %v259 = vld [vmem:[#allocation7 + $0x50] sm:$0xff]
    %v260 = vld [vmem:[#allocation7 + $0x58] sm:$0xff]
    %v261 = vld [vmem:[#allocation7 + $0x60] sm:$0xff]
    %v262 = vld [vmem:[#allocation7 + $0x68] sm:$0xff]
    %v263 = vld [vmem:[#allocation7 + $0x70] sm:$0xff]
    %v264 = vld [vmem:[#allocation7 + $0x78] sm:$0xff]
    %v265 = vld [vmem:[#allocation7 + $0x80] sm:$0xff]
    %v266 = vld [vmem:[#allocation7 + $0x88] sm:$0xff]
    %v267 = vld [vmem:[#allocation7 + $0x90] sm:$0xff]
    %v268 = vld [vmem:[#allocation7 + $0x98] sm:$0xff]
    %v269 = vld [vmem:[#allocation7 + $0xa0] sm:$0xff]
    %v270 = vld [vmem:[#allocation7 + $0xa8] sm:$0xff]
    %v271 = vld [vmem:[#allocation7 + $0xb0] sm:$0xff]
    %v272 = vld [vmem:[#allocation7 + $0xb8] sm:$0xff]
    %v273 = vld [vmem:[#allocation7 + $0xc0] sm:$0xff]
    %v274 = vld [vmem:[#allocation7 + $0xc8] sm:$0xff]
    %v275 = vld [vmem:[#allocation7 + $0xd0] sm:$0xff]
    %v276 = vld [vmem:[#allocation7 + $0xd8] sm:$0xff]
    %v277 = vld [vmem:[#allocation7 + $0xe0] sm:$0xff]
    %v278 = vld [vmem:[#allocation7 + $0xe8] sm:$0xff]
    %v279 = vld [vmem:[#allocation7 + $0xf0] sm:$0xff]
    %v280 = vld [vmem:[#allocation7 + $0xf8] sm:$0xff]
    %v281 = vld [vmem:[#allocation7 + $0x100] sm:$0xff]
    %v282 = vld [vmem:[#allocation7 + $0x108] sm:$0xff]
    %v283 = vld [vmem:[#allocation7 + $0x110] sm:$0xff]
    %v284 = vld [vmem:[#allocation7 + $0x118] sm:$0xff]
    %v285 = vld [vmem:[#allocation7 + $0x120] sm:$0xff]
    %v286 = vld [vmem:[#allocation7 + $0x128] sm:$0xff]
    %v287 = vld [vmem:[#allocation7 + $0x130] sm:$0xff]
    %v288 = vld [vmem:[#allocation7 + $0x138] sm:$0xff]
    %v289 = vld [vmem:[#allocation7 + $0x140] sm:$0xff]
    %v290 = vld [vmem:[#allocation7 + $0x148] sm:$0xff]
    %v291 = vld [vmem:[#allocation7 + $0x150] sm:$0xff]
    %v292 = vld [vmem:[#allocation7 + $0x158] sm:$0xff]
    %v293 = vld [vmem:[#allocation7 + $0x160] sm:$0xff]
    %v294 = vld [vmem:[#allocation7 + $0x168] sm:$0xff]
    %v295 = vld [vmem:[#allocation7 + $0x170] sm:$0xff]
    %v296 = vld [vmem:[#allocation7 + $0x178] sm:$0xff]
    %v297 = vld [vmem:[#allocation7 + $0x180] sm:$0xff]
    %v298 = vld [vmem:[#allocation7 + $0x188] sm:$0xff]
    %v299 = vld [vmem:[#allocation7 + $0x190] sm:$0xff]
    %v300 = vld [vmem:[#allocation7 + $0x198] sm:$0xff]
    %v301 = vld [vmem:[#allocation7 + $0x1a0] sm:$0xff]
    %v302 = vld [vmem:[#allocation7 + $0x1a8] sm:$0xff]
    %v303 = vld [vmem:[#allocation7 + $0x1b0] sm:$0xff]
    %v304 = vld [vmem:[#allocation7 + $0x1b8] sm:$0xff]
    %v305 = vld [vmem:[#allocation7 + $0x1c0] sm:$0xff]
    %v306 = vld [vmem:[#allocation7 + $0x1c8] sm:$0xff]
    %v307 = vld [vmem:[#allocation7 + $0x1d0] sm:$0xff]
    %v308 = vld [vmem:[#allocation7 + $0x1d8] sm:$0xff]
    %v309 = vld [vmem:[#allocation7 + $0x1e0] sm:$0xff]
    %v310 = vld [vmem:[#allocation7 + $0x1e8] sm:$0xff]
    %v311 = vld [vmem:[#allocation7 + $0x1f0] sm:$0xff]
    %v312 = vld [vmem:[#allocation7 + $0x1f8] sm:$0xff]
    %v313 = vld [vmem:[%s4] sm:$0x3]
    %v315 = vlaneseq
    %v316 = vshrl.u32 %v315, 7
    %v317 = vsub.s32 0, %v316
    %v318 = vrot.slane %v313, %v317
    %v319 = vlaneseq
    %v320 = vshrl.u32 %v319, 7
    %v321 = vsub.s32 1, %v320
    %v322 = vrot.slane %v313, %v321
    %v389 = vunpack.c.l.b16 %v249
    %v390 = vunpack.c.h.b16 %v249
    %v391 = vunpack.c.l.b16 %v250
    %v392 = vunpack.c.h.b16 %v250
    %v393 = vunpack.c.l.b16 %v251
    %v394 = vunpack.c.h.b16 %v251
    %v395 = vunpack.c.l.b16 %v252
    %v396 = vunpack.c.h.b16 %v252
    %v397 = vunpack.c.l.b16 %v253
    %v398 = vunpack.c.h.b16 %v253
    %v399 = vunpack.c.l.b16 %v254
    %v400 = vunpack.c.h.b16 %v254
    %v401 = vunpack.c.l.b16 %v255
    %v402 = vunpack.c.h.b16 %v255
    %v403 = vunpack.c.l.b16 %v256
    %v404 = vunpack.c.h.b16 %v256
    %v405 = vunpack.c.l.b16 %v257
    %v406 = vunpack.c.h.b16 %v257
    %v407 = vunpack.c.l.b16 %v258
    %v408 = vunpack.c.h.b16 %v258
    %v409 = vunpack.c.l.b16 %v259
    %v410 = vunpack.c.h.b16 %v259
    %v411 = vunpack.c.l.b16 %v260
    %v412 = vunpack.c.h.b16 %v260
    %v413 = vunpack.c.l.b16 %v261
    %v414 = vunpack.c.h.b16 %v261
    %v415 = vunpack.c.l.b16 %v262
    %v416 = vunpack.c.h.b16 %v262
    %v417 = vunpack.c.l.b16 %v263
    %v418 = vunpack.c.h.b16 %v263
    %v419 = vunpack.c.l.b16 %v264
    %v420 = vunpack.c.h.b16 %v264
    %v421 = vunpack.c.l.b16 %v265
    %v422 = vunpack.c.h.b16 %v265
    %v423 = vunpack.c.l.b16 %v266
    %v424 = vunpack.c.h.b16 %v266
    %v425 = vunpack.c.l.b16 %v267
    %v426 = vunpack.c.h.b16 %v267
    %v427 = vunpack.c.l.b16 %v268
    %v428 = vunpack.c.h.b16 %v268
    %v429 = vunpack.c.l.b16 %v269
    %v430 = vunpack.c.h.b16 %v269
    %v431 = vunpack.c.l.b16 %v270
    %v432 = vunpack.c.h.b16 %v270
    %v433 = vunpack.c.l.b16 %v271
    %v434 = vunpack.c.h.b16 %v271
    %v435 = vunpack.c.l.b16 %v272
    %v436 = vunpack.c.h.b16 %v272
    %v437 = vunpack.c.l.b16 %v273
    %v438 = vunpack.c.h.b16 %v273
    %v439 = vunpack.c.l.b16 %v274
    %v440 = vunpack.c.h.b16 %v274
    %v441 = vunpack.c.l.b16 %v275
    %v442 = vunpack.c.h.b16 %v275
    %v443 = vunpack.c.l.b16 %v276
    %v444 = vunpack.c.h.b16 %v276
    %v445 = vunpack.c.l.b16 %v277
    %v446 = vunpack.c.h.b16 %v277
    %v447 = vunpack.c.l.b16 %v278
    %v448 = vunpack.c.h.b16 %v278
    %v449 = vunpack.c.l.b16 %v279
    %v450 = vunpack.c.h.b16 %v279
    %v451 = vunpack.c.l.b16 %v280
    %v452 = vunpack.c.h.b16 %v280
    %v453 = vunpack.c.l.b16 %v281
    %v454 = vunpack.c.h.b16 %v281
    %v455 = vunpack.c.l.b16 %v282
    %v456 = vunpack.c.h.b16 %v282
    %v457 = vunpack.c.l.b16 %v283
    %v458 = vunpack.c.h.b16 %v283
    %v459 = vunpack.c.l.b16 %v284
    %v460 = vunpack.c.h.b16 %v284
    %v461 = vunpack.c.l.b16 %v285
    %v462 = vunpack.c.h.b16 %v285
    %v463 = vunpack.c.l.b16 %v286
    %v464 = vunpack.c.h.b16 %v286
    %v465 = vunpack.c.l.b16 %v287
    %v466 = vunpack.c.h.b16 %v287
    %v467 = vunpack.c.l.b16 %v288
    %v468 = vunpack.c.h.b16 %v288
    %v469 = vunpack.c.l.b16 %v289
    %v470 = vunpack.c.h.b16 %v289
    %v471 = vunpack.c.l.b16 %v290
    %v472 = vunpack.c.h.b16 %v290
    %v473 = vunpack.c.l.b16 %v291
    %v474 = vunpack.c.h.b16 %v291
    %v475 = vunpack.c.l.b16 %v292
    %v476 = vunpack.c.h.b16 %v292
    %v477 = vunpack.c.l.b16 %v293
    %v478 = vunpack.c.h.b16 %v293
    %v479 = vunpack.c.l.b16 %v294
    %v480 = vunpack.c.h.b16 %v294
    %v481 = vunpack.c.l.b16 %v295
    %v482 = vunpack.c.h.b16 %v295
    %v483 = vunpack.c.l.b16 %v296
    %v484 = vunpack.c.h.b16 %v296
    %v485 = vunpack.c.l.b16 %v297
    %v486 = vunpack.c.h.b16 %v297
    %v487 = vunpack.c.l.b16 %v298
    %v488 = vunpack.c.h.b16 %v298
    %v489 = vunpack.c.l.b16 %v299
    %v490 = vunpack.c.h.b16 %v299
    %v491 = vunpack.c.l.b16 %v300
    %v492 = vunpack.c.h.b16 %v300
    %v493 = vunpack.c.l.b16 %v301
    %v494 = vunpack.c.h.b16 %v301
    %v495 = vunpack.c.l.b16 %v302
    %v496 = vunpack.c.h.b16 %v302
    %v497 = vunpack.c.l.b16 %v303
    %v498 = vunpack.c.h.b16 %v303
    %v499 = vunpack.c.l.b16 %v304
    %v500 = vunpack.c.h.b16 %v304
    %v501 = vunpack.c.l.b16 %v305
    %v502 = vunpack.c.h.b16 %v305
    %v503 = vunpack.c.l.b16 %v306
    %v504 = vunpack.c.h.b16 %v306
    %v505 = vunpack.c.l.b16 %v307
    %v506 = vunpack.c.h.b16 %v307
    %v507 = vunpack.c.l.b16 %v308
    %v508 = vunpack.c.h.b16 %v308
    %v509 = vunpack.c.l.b16 %v309
    %v510 = vunpack.c.h.b16 %v309
    %v511 = vunpack.c.l.b16 %v310
    %v512 = vunpack.c.h.b16 %v310
    %v513 = vunpack.c.l.b16 %v311
    %v514 = vunpack.c.h.b16 %v311
    %v515 = vunpack.c.l.b16 %v312
    %v516 = vunpack.c.h.b16 %v312
    %v517 = vpack.c.b16 %v391, %v389
    %v518 = vpack.c.b16 %v392, %v390
    %v519 = vpack.c.b16 %v395, %v393
    %v520 = vpack.c.b16 %v396, %v394
    %v521 = vpack.c.b16 %v399, %v397
    %v522 = vpack.c.b16 %v400, %v398
    %v523 = vpack.c.b16 %v403, %v401
    %v524 = vpack.c.b16 %v404, %v402
    %v525 = vpack.c.b16 %v407, %v405
    %v526 = vpack.c.b16 %v408, %v406
    %v527 = vpack.c.b16 %v411, %v409
    %v528 = vpack.c.b16 %v412, %v410
    %v529 = vpack.c.b16 %v415, %v413
    %v530 = vpack.c.b16 %v416, %v414
    %v531 = vpack.c.b16 %v419, %v417
    %v532 = vpack.c.b16 %v420, %v418
    %v533 = vpack.c.b16 %v423, %v421
    %v534 = vpack.c.b16 %v424, %v422
    %v535 = vpack.c.b16 %v427, %v425
    %v536 = vpack.c.b16 %v428, %v426
    %v537 = vpack.c.b16 %v431, %v429
    %v538 = vpack.c.b16 %v432, %v430
    %v539 = vpack.c.b16 %v435, %v433
    %v540 = vpack.c.b16 %v436, %v434
    %v541 = vpack.c.b16 %v439, %v437
    %v542 = vpack.c.b16 %v440, %v438
    %v543 = vpack.c.b16 %v443, %v441
    %v544 = vpack.c.b16 %v444, %v442
    %v545 = vpack.c.b16 %v447, %v445
    %v546 = vpack.c.b16 %v448, %v446
    %v547 = vpack.c.b16 %v451, %v449
    %v548 = vpack.c.b16 %v452, %v450
    %v549 = vpack.c.b16 %v455, %v453
    %v550 = vpack.c.b16 %v456, %v454
    %v551 = vpack.c.b16 %v459, %v457
    %v552 = vpack.c.b16 %v460, %v458
    %v553 = vpack.c.b16 %v463, %v461
    %v554 = vpack.c.b16 %v464, %v462
    %v555 = vpack.c.b16 %v467, %v465
    %v556 = vpack.c.b16 %v468, %v466
    %v557 = vpack.c.b16 %v471, %v469
    %v558 = vpack.c.b16 %v472, %v470
    %v559 = vpack.c.b16 %v475, %v473
    %v560 = vpack.c.b16 %v476, %v474
    %v561 = vpack.c.b16 %v479, %v477
    %v562 = vpack.c.b16 %v480, %v478
    %v563 = vpack.c.b16 %v483, %v481
    %v564 = vpack.c.b16 %v484, %v482
    %v565 = vpack.c.b16 %v487, %v485
    %v566 = vpack.c.b16 %v488, %v486
    %v567 = vpack.c.b16 %v491, %v489
    %v568 = vpack.c.b16 %v492, %v490
    %v569 = vpack.c.b16 %v495, %v493
    %v570 = vpack.c.b16 %v496, %v494
    %v571 = vpack.c.b16 %v499, %v497
    %v572 = vpack.c.b16 %v500, %v498
    %v573 = vpack.c.b16 %v503, %v501
    %v574 = vpack.c.b16 %v504, %v502
    %v575 = vpack.c.b16 %v507, %v505
    %v576 = vpack.c.b16 %v508, %v506
    %v577 = vpack.c.b16 %v511, %v509
    %v578 = vpack.c.b16 %v512, %v510
    %v579 = vpack.c.b16 %v515, %v513
    %v580 = vpack.c.b16 %v516, %v514
    %645 = vmatprep.subr.bf16.mxu0 %v518
    %646 = vmatpush1.bf16.msra.mxu0 %v517
    %647 = vmatprep.subr.bf16.mxu0 %v520
    %648 = vmatpush1.bf16.msra.mxu0 %v519
    %649 = vmatprep.subr.bf16.mxu0 %v522
    %650 = vmatpush1.bf16.msra.mxu0 %v521
    %651 = vmatprep.subr.bf16.mxu0 %v524
    %652 = vmatpush1.bf16.msra.mxu0 %v523
    %653 = vmatprep.subr.bf16.mxu0 %v526
    %654 = vmatpush1.bf16.msra.mxu0 %v525
    %655 = vmatprep.subr.bf16.mxu0 %v528
    %656 = vmatpush1.bf16.msra.mxu0 %v527
    %657 = vmatprep.subr.bf16.mxu0 %v530
    %658 = vmatpush1.bf16.msra.mxu0 %v529
    %659 = vmatprep.subr.bf16.mxu0 %v532
    %660 = vmatpush1.bf16.msra.mxu0 %v531
    %661 = vmatprep.subr.bf16.mxu0 %v534
    %662 = vmatpush1.bf16.msra.mxu0 %v533
    %663 = vmatprep.subr.bf16.mxu0 %v536
    %664 = vmatpush1.bf16.msra.mxu0 %v535
    %665 = vmatprep.subr.bf16.mxu0 %v538
    %666 = vmatpush1.bf16.msra.mxu0 %v537
    %667 = vmatprep.subr.bf16.mxu0 %v540
    %668 = vmatpush1.bf16.msra.mxu0 %v539
    %669 = vmatprep.subr.bf16.mxu0 %v542
    %670 = vmatpush1.bf16.msra.mxu0 %v541
    %671 = vmatprep.subr.bf16.mxu0 %v544
    %672 = vmatpush1.bf16.msra.mxu0 %v543
    %673 = vmatprep.subr.bf16.mxu0 %v546
    %674 = vmatpush1.bf16.msra.mxu0 %v545
    %675 = vmatprep.subr.bf16.mxu0 %v548
    %676 = vmatpush1.bf16.msra.mxu0 %v547
    %677 = vmatprep.mubr.bf16.mxu0 %v246
    %678 = vmatmul.mubr.bf16.gmra.mrb[0].mxu0 %v245
    %v679 = vpop.f32.mrb[0].mxu0
    %v680 = vadd.f32 %v318, %v679
    %v681 = vpop.f32.mrb[0].mxu0
    %v682 = vadd.f32 %v322, %v681
    %v683 = vpop.f32.mrb[0].mxu0
    %v684 = vpop.f32.mrb[0].mxu0
    %685 = vdwg.mxu0
    %686 = vmatprep.subr.bf16.mxu0 %v550
    %687 = vmatpush1.bf16.msra.mxu0 %v549
    %688 = vmatprep.subr.bf16.mxu0 %v552
    %689 = vmatpush1.bf16.msra.mxu0 %v551
    %690 = vmatprep.subr.bf16.mxu0 %v554
    %691 = vmatpush1.bf16.msra.mxu0 %v553
    %692 = vmatprep.subr.bf16.mxu0 %v556
    %693 = vmatpush1.bf16.msra.mxu0 %v555
    %694 = vmatprep.subr.bf16.mxu0 %v558
    %695 = vmatpush1.bf16.msra.mxu0 %v557
    %696 = vmatprep.subr.bf16.mxu0 %v560
    %697 = vmatpush1.bf16.msra.mxu0 %v559
    %698 = vmatprep.subr.bf16.mxu0 %v562
    %699 = vmatpush1.bf16.msra.mxu0 %v561
    %700 = vmatprep.subr.bf16.mxu0 %v564
    %701 = vmatpush1.bf16.msra.mxu0 %v563
    %702 = vmatprep.subr.bf16.mxu0 %v566
    %703 = vmatpush1.bf16.msra.mxu0 %v565
    %704 = vmatprep.subr.bf16.mxu0 %v568
    %705 = vmatpush1.bf16.msra.mxu0 %v567
    %706 = vmatprep.subr.bf16.mxu0 %v570
    %707 = vmatpush1.bf16.msra.mxu0 %v569
    %708 = vmatprep.subr.bf16.mxu0 %v572
    %709 = vmatpush1.bf16.msra.mxu0 %v571
    %710 = vmatprep.subr.bf16.mxu0 %v574
    %711 = vmatpush1.bf16.msra.mxu0 %v573
    %712 = vmatprep.subr.bf16.mxu0 %v576
    %713 = vmatpush1.bf16.msra.mxu0 %v575
    %714 = vmatprep.subr.bf16.mxu0 %v578
    %715 = vmatpush1.bf16.msra.mxu0 %v577
    %716 = vmatprep.subr.bf16.mxu0 %v580
    %717 = vmatpush1.bf16.msra.mxu0 %v579
    %718 = vmatprep.mubr.bf16.mxu0 %v248
    %719 = vmatmul.mubr.bf16.gmra.mrb[0].mxu0 %v247
    %v720 = vpop.f32.mrb[0].mxu0
    %v721 = vadd.f32 %v680, %v720
    %v722 = vpop.f32.mrb[0].mxu0
    %v723 = vadd.f32 %v682, %v722
    %v724 = vpop.f32.mrb[0].mxu0
    %v725 = vpop.f32.mrb[0].mxu0
    %726 = vdwg.mxu0
    %vm727 = vcmp.ge.f32.partialorder %v721, 0.0
    %vm728 = vcmp.ge.f32.partialorder %v723, 0.0
    %v729 = vmul.f32 %v721, 0.01
    %v730 = vmul.f32 %v723, 0.01
    %v731 = vsel %vm727, %v721, %v729
    %v732 = vsel %vm728, %v723, %v730
    %v733 = vpack.c.bf16 %v731, %v731
    %v734 = vpack.c.bf16 %v732, %v732
    %v735 = vld [vmem:[#allocation8] sm:$0xf]
    %v736 = vld [vmem:[#allocation8 + $0x4] sm:$0xf]
    %v737 = vld [vmem:[#allocation8 + $0x8] sm:$0xf]
    %v738 = vld [vmem:[#allocation8 + $0xc] sm:$0xf]
    %v739 = vld [vmem:[#allocation8 + $0x10] sm:$0xf]
    %v740 = vld [vmem:[#allocation8 + $0x14] sm:$0xf]
    %v741 = vld [vmem:[#allocation8 + $0x18] sm:$0xf]
    %v742 = vld [vmem:[#allocation8 + $0x1c] sm:$0xf]
    %v743 = vld [vmem:[#allocation8 + $0x20] sm:$0xf]
    %v744 = vld [vmem:[#allocation8 + $0x24] sm:$0xf]
    %v745 = vld [vmem:[#allocation8 + $0x28] sm:$0xf]
    %v746 = vld [vmem:[#allocation8 + $0x2c] sm:$0xf]
    %v747 = vld [vmem:[#allocation8 + $0x30] sm:$0xf]
    %v748 = vld [vmem:[#allocation8 + $0x34] sm:$0xf]
    %v749 = vld [vmem:[#allocation8 + $0x38] sm:$0xf]
    %v750 = vld [vmem:[#allocation8 + $0x3c] sm:$0xf]
    %v751 = vld [vmem:[#allocation8 + $0x40] sm:$0xf]
    %v752 = vld [vmem:[#allocation8 + $0x44] sm:$0xf]
    %v753 = vld [vmem:[#allocation8 + $0x48] sm:$0xf]
    %v754 = vld [vmem:[#allocation8 + $0x4c] sm:$0xf]
    %v755 = vld [vmem:[#allocation8 + $0x50] sm:$0xf]
    %v756 = vld [vmem:[#allocation8 + $0x54] sm:$0xf]
    %v757 = vld [vmem:[#allocation8 + $0x58] sm:$0xf]
    %v758 = vld [vmem:[#allocation8 + $0x5c] sm:$0xf]
    %v759 = vld [vmem:[#allocation8 + $0x60] sm:$0xf]
    %v760 = vld [vmem:[#allocation8 + $0x64] sm:$0xf]
    %v761 = vld [vmem:[#allocation8 + $0x68] sm:$0xf]
    %v762 = vld [vmem:[#allocation8 + $0x6c] sm:$0xf]
    %v763 = vld [vmem:[#allocation8 + $0x70] sm:$0xf]
    %v764 = vld [vmem:[#allocation8 + $0x74] sm:$0xf]
    %v765 = vld [vmem:[#allocation8 + $0x78] sm:$0xf]
    %v766 = vld [vmem:[#allocation8 + $0x7c] sm:$0xf]
    %v767 = vld [vmem:[%s6] sm:$0x1]
    %v769 = vlaneseq
    %v770 = vshrl.u32 %v769, 7
    %v771 = vsub.s32 0, %v770
    %v772 = vrot.slane %v767, %v771
    %v806 = vunpack.c.l.b16 %v735
    %v807 = vunpack.c.l.b16 %v736
    %v808 = vunpack.c.l.b16 %v737
    %v809 = vunpack.c.l.b16 %v738
    %v810 = vunpack.c.l.b16 %v739
    %v811 = vunpack.c.l.b16 %v740
    %v812 = vunpack.c.l.b16 %v741
    %v813 = vunpack.c.l.b16 %v742
    %v814 = vunpack.c.l.b16 %v743
    %v815 = vunpack.c.l.b16 %v744
    %v816 = vunpack.c.l.b16 %v745
    %v817 = vunpack.c.l.b16 %v746
    %v818 = vunpack.c.l.b16 %v747
    %v819 = vunpack.c.l.b16 %v748
    %v820 = vunpack.c.l.b16 %v749
    %v821 = vunpack.c.l.b16 %v750
    %v822 = vunpack.c.l.b16 %v751
    %v823 = vunpack.c.l.b16 %v752
    %v824 = vunpack.c.l.b16 %v753
    %v825 = vunpack.c.l.b16 %v754
    %v826 = vunpack.c.l.b16 %v755
    %v827 = vunpack.c.l.b16 %v756
    %v828 = vunpack.c.l.b16 %v757
    %v829 = vunpack.c.l.b16 %v758
    %v830 = vunpack.c.l.b16 %v759
    %v831 = vunpack.c.l.b16 %v760
    %v832 = vunpack.c.l.b16 %v761
    %v833 = vunpack.c.l.b16 %v762
    %v834 = vunpack.c.l.b16 %v763
    %v835 = vunpack.c.l.b16 %v764
    %v836 = vunpack.c.l.b16 %v765
    %v837 = vunpack.c.l.b16 %v766
    %v838 = vpack.c.b16 %v807, %v806
    %v839 = vpack.c.b16 %v809, %v808
    %v840 = vpack.c.b16 %v811, %v810
    %v841 = vpack.c.b16 %v813, %v812
    %v842 = vpack.c.b16 %v815, %v814
    %v843 = vpack.c.b16 %v817, %v816
    %v844 = vpack.c.b16 %v819, %v818
    %v845 = vpack.c.b16 %v821, %v820
    %v846 = vpack.c.b16 %v823, %v822
    %v847 = vpack.c.b16 %v825, %v824
    %v848 = vpack.c.b16 %v827, %v826
    %v849 = vpack.c.b16 %v829, %v828
    %v850 = vpack.c.b16 %v831, %v830
    %v851 = vpack.c.b16 %v833, %v832
    %v852 = vpack.c.b16 %v835, %v834
    %v853 = vpack.c.b16 %v837, %v836
    %870 = vmatprep.subr.bf16.mxu0 0
    %871 = vmatpush1.bf16.msra.mxu0 %v838
    %872 = vmatprep.subr.bf16.mxu0 0
    %873 = vmatpush1.bf16.msra.mxu0 %v839
    %874 = vmatprep.subr.bf16.mxu0 0
    %875 = vmatpush1.bf16.msra.mxu0 %v840
    %876 = vmatprep.subr.bf16.mxu0 0
    %877 = vmatpush1.bf16.msra.mxu0 %v841
    %878 = vmatprep.subr.bf16.mxu0 0
    %879 = vmatpush1.bf16.msra.mxu0 %v842
    %880 = vmatprep.subr.bf16.mxu0 0
    %881 = vmatpush1.bf16.msra.mxu0 %v843
    %882 = vmatprep.subr.bf16.mxu0 0
    %883 = vmatpush1.bf16.msra.mxu0 %v844
    %884 = vmatprep.subr.bf16.mxu0 0
    %885 = vmatpush1.bf16.msra.mxu0 %v845
    %886 = vmatprep.subr.bf16.mxu0 0
    %887 = vmatpush1.bf16.msra.mxu0 %v846
    %888 = vmatprep.subr.bf16.mxu0 0
    %889 = vmatpush1.bf16.msra.mxu0 %v847
    %890 = vmatprep.subr.bf16.mxu0 0
    %891 = vmatpush1.bf16.msra.mxu0 %v848
    %892 = vmatprep.subr.bf16.mxu0 0
    %893 = vmatpush1.bf16.msra.mxu0 %v849
    %894 = vmatprep.subr.bf16.mxu0 0
    %895 = vmatpush1.bf16.msra.mxu0 %v850
    %896 = vmatprep.subr.bf16.mxu0 0
    %897 = vmatpush1.bf16.msra.mxu0 %v851
    %898 = vmatprep.subr.bf16.mxu0 0
    %899 = vmatpush1.bf16.msra.mxu0 %v852
    %900 = vmatprep.subr.bf16.mxu0 0
    %901 = vmatpush1.bf16.msra.mxu0 %v853
    %902 = vmatprep.mubr.bf16.mxu0 %v734
    %903 = vmatmul.mubr.bf16.gmra.mrb[0].mxu0 %v733
    %v904 = vpop.f32.mrb[0].mxu0
    %v905 = vadd.f32 %v772, %v904
    %v906 = vpop.f32.mrb[0].mxu0
    %v907 = vpop.f32.mrb[0].mxu0
    %v908 = vpop.f32.mrb[0].mxu0
    %909 = vdwg.mxu0
    %vm910 = vcmp.ge.f32.partialorder %v905, 0.0
    %v911 = vmul.f32 %v905, 0.01
    %v912 = vsel %vm910, %v905, %v911
    %v913 = vpack.c.bf16 %v912, %v912
    %v914 = vld [vmem:[#allocation10] sm:$0xf]
    %v915 = vld [vmem:[#allocation10 + $0x4] sm:$0xf]
    %v916 = vld [vmem:[#allocation10 + $0x8] sm:$0xf]
    %v917 = vld [vmem:[#allocation10 + $0xc] sm:$0xf]
    %v918 = vld [vmem:[#allocation10 + $0x10] sm:$0xf]
    %v919 = vld [vmem:[#allocation10 + $0x14] sm:$0xf]
    %v920 = vld [vmem:[#allocation10 + $0x18] sm:$0xf]
    %v921 = vld [vmem:[#allocation10 + $0x1c] sm:$0xf]
    %v922 = vld [vmem:[#allocation10 + $0x20] sm:$0xf]
    %v923 = vld [vmem:[#allocation10 + $0x24] sm:$0xf]
    %v924 = vld [vmem:[#allocation10 + $0x28] sm:$0xf]
    %v925 = vld [vmem:[#allocation10 + $0x2c] sm:$0xf]
    %v926 = vld [vmem:[#allocation10 + $0x30] sm:$0xf]
    %v927 = vld [vmem:[#allocation10 + $0x34] sm:$0xf]
    %v928 = vld [vmem:[#allocation10 + $0x38] sm:$0xf]
    %v929 = vld [vmem:[#allocation10 + $0x3c] sm:$0xf]
    %v930 = vld [vmem:[%s8] sm:$0x1]
    %v932 = vlaneseq
    %v933 = vshrl.u32 %v932, 7
    %v934 = vsub.s32 0, %v933
    %v935 = vrot.slane %v930, %v934
    %v953 = vunpack.c.l.b16 %v914
    %v954 = vunpack.c.l.b16 %v915
    %v955 = vunpack.c.l.b16 %v916
    %v956 = vunpack.c.l.b16 %v917
    %v957 = vunpack.c.l.b16 %v918
    %v958 = vunpack.c.l.b16 %v919
    %v959 = vunpack.c.l.b16 %v920
    %v960 = vunpack.c.l.b16 %v921
    %v961 = vunpack.c.l.b16 %v922
    %v962 = vunpack.c.l.b16 %v923
    %v963 = vunpack.c.l.b16 %v924
    %v964 = vunpack.c.l.b16 %v925
    %v965 = vunpack.c.l.b16 %v926
    %v966 = vunpack.c.l.b16 %v927
    %v967 = vunpack.c.l.b16 %v928
    %v968 = vunpack.c.l.b16 %v929
    %v969 = vpack.c.b16 %v954, %v953
    %v970 = vpack.c.b16 %v956, %v955
    %v971 = vpack.c.b16 %v958, %v957
    %v972 = vpack.c.b16 %v960, %v959
    %v973 = vpack.c.b16 %v962, %v961
    %v974 = vpack.c.b16 %v964, %v963
    %v975 = vpack.c.b16 %v966, %v965
    %v976 = vpack.c.b16 %v968, %v967
    %985 = vmatprep.subr.bf16.mxu0 0
    %986 = vmatpush1.bf16.msra.mxu0 %v969
    %987 = vmatprep.subr.bf16.mxu0 0
    %988 = vmatpush1.bf16.msra.mxu0 %v970
    %989 = vmatprep.subr.bf16.mxu0 0
    %990 = vmatpush1.bf16.msra.mxu0 %v971
    %991 = vmatprep.subr.bf16.mxu0 0
    %992 = vmatpush1.bf16.msra.mxu0 %v972
    %993 = vmatprep.subr.bf16.mxu0 0
    %994 = vmatpush1.bf16.msra.mxu0 %v973
    %995 = vmatprep.subr.bf16.mxu0 0
    %996 = vmatpush1.bf16.msra.mxu0 %v974
    %997 = vmatprep.subr.bf16.mxu0 0
    %998 = vmatpush1.bf16.msra.mxu0 %v975
    %999 = vmatprep.subr.bf16.mxu0 0
    %1000 = vmatpush1.bf16.msra.mxu0 %v976
    %1001 = vmatprep.subr.bf16.mxu0 0
    %1002 = vmatpush1.bf16.msra.mxu0 0
    %1003 = vmatprep.subr.bf16.mxu0 0
    %1004 = vmatpush1.bf16.msra.mxu0 0
    %1005 = vmatprep.subr.bf16.mxu0 0
    %1006 = vmatpush1.bf16.msra.mxu0 0
    %1007 = vmatprep.subr.bf16.mxu0 0
    %1008 = vmatpush1.bf16.msra.mxu0 0
    %1009 = vmatprep.subr.bf16.mxu0 0
    %1010 = vmatpush1.bf16.msra.mxu0 0
    %1011 = vmatprep.subr.bf16.mxu0 0
    %1012 = vmatpush1.bf16.msra.mxu0 0
    %1013 = vmatprep.subr.bf16.mxu0 0
    %1014 = vmatpush1.bf16.msra.mxu0 0
    %1015 = vmatprep.subr.bf16.mxu0 0
    %1016 = vmatpush1.bf16.msra.mxu0 0
    %1017 = vmatprep.mubr.bf16.mxu0 0
    %1018 = vmatmul.mubr.bf16.gmra.mrb[0].mxu0 %v913
    %v1019 = vpop.f32.mrb[0].mxu0
    %v1020 = vadd.f32 %v935, %v1019
    %v1021 = vpop.f32.mrb[0].mxu0
    %v1022 = vpop.f32.mrb[0].mxu0
    %v1023 = vpop.f32.mrb[0].mxu0
    %1024 = vdwg.mxu0
    %1025 = vst [vmem:[#allocation11] sm:$0xff] %v1020
    // Predicated region
    $region58: #{tpu_custom_call.1} parent=1 // pred_check
      _
    $region59: #{tpu_custom_call.1} parent=1 // pred_check_branch
      %1027 = sbr.rel (0) target = $region61
    $region60: #{tpu_custom_call.1} parent=1 // pred_region
      %s1029 = ssub.s32 128, 128
      %1030 = vsyncadd [#allocation4], %s1029
      %s1032 = sshll.u32 [#allocation11], 4
      %s1033 = int_to_ptr.vmem [resolvable:$true] %s1032
      %1035 = dma.vmem_to_hbm [thread:$0]  %s1033, 128, %s9, [#allocation4]
    $region61: #{tpu_custom_call.1} parent=1 // pred_fallthru
      _
    // Predicated region
    $region62: #{tpu_custom_call.1} parent=1 // pred_check
      _
    $region63: #{tpu_custom_call.1} parent=1 // pred_check_branch
      %1037 = sbr.rel (0) target = $region65
    $region64: #{tpu_custom_call.1} parent=1 // pred_region
      %1038 = dma.done [#allocation4], 128
    $region65: #{tpu_custom_call.1} parent=1 // pred_fallthru
      _
    %1039 = vsyncpa [#allocation3], 1
    %1040 = vsyncpa [#allocation6], 1
    %1041 = vsyncpa [#allocation9], 1
    %1042 = vsyncpa [#allocation4], 1

</llo_original>
